<compile_context>
chip_gen: v6e
topology: v6e:2x2x1
jax: 0.10.0
libtpu: 0.0.40
codegen_flags: <defaults>
</compile_context>

<pallas_src>
import math

import jax
import jax.numpy as jnp
from jax.experimental import pallas as pl
from jax.experimental.pallas import tpu as pltpu


def _center_kernel(w_ref, out_ref):
    # Identity materialization of the cluster centers.  The output buffer is
    # aliased to the input (input_output_aliases={0: 0}), so this is a single
    # VMEM load/store pass over a tiny tile; the (32, 16) tail lanes cost one
    # masked vst on a sub-vreg tile, which is noise next to launch overhead.
    out_ref[...] = w_ref[...]


def generate_center(feature, cluster_weights):
    """Pallas equivalent of GenerateCenter.forward.

    :param feature: [B, f, N] -- ignored, exactly like the PyTorch module.
    :param cluster_weights: [feature_size, cluster_size]
    :return: center: [feature_size, cluster_size]
    """
    del feature  # The reference forward does not use it (never DMA'd).

    # Whole-array VMEM residency guard: input + aliased output must fit well
    # under the scoped VMEM limit (32 MiB default on v7x).  For realistic
    # NetVLAD parameter sizes (KiB scale) this always passes.
    nbytes = cluster_weights.size * jnp.dtype(cluster_weights.dtype).itemsize
    assert 2 * nbytes <= 16 * 1024 * 1024, (
        "cluster_weights too large for whole-array VMEM residency; "
        "use a tiled grid for this size."
    )

    return pl.pallas_call(
        _center_kernel,
        out_shape=jax.ShapeDtypeStruct(
            cluster_weights.shape, cluster_weights.dtype
        ),
        # Whole-array, single-block, VMEM-resident specs: no grid loop,
        # no index_map, no pipelining machinery for a one-shot copy.
        in_specs=[pl.BlockSpec(memory_space=pltpu.MemorySpace.VMEM)],
        out_specs=pl.BlockSpec(memory_space=pltpu.MemorySpace.VMEM),
        # Output aliases the parameter buffer directly (no reshaped temporary
        # in between) -> no new HBM allocation, no extra HBM round trip.
        input_output_aliases={0: 0},
    )(cluster_weights)
    # TODO(synk): in a full NetVLAD pipeline, fuse the downstream
    # soft-assignment matmul (feature [B,f,N] contracted with centers [f,K])
    # into this pallas_call so the centers stay VMEM-resident and the MXU sees
    # >=256-row LHS tiles; the reference module's forward only returns the
    # parameter, so that fusion is out of scope here.


if __name__ == "__main__":
    # Small, deterministic shapes consistent with the module.
    B, feature_size, N = 2, 32, 8
    cluster_size = 16
    VLADNet_ipt_size = N  # unused by forward, kept for fidelity

    key = jax.random.PRNGKey(0)
    k_w, k_x = jax.random.split(key)

    # nn.Parameter(torch.randn(feature_size, cluster_size) / sqrt(feature_size))
    cluster_weights = (
        jax.random.normal(k_w, (feature_size, cluster_size), dtype=jnp.float32)
        * (1.0 / math.sqrt(feature_size))
    )
    feature = jax.random.normal(k_x, (B, feature_size, N), dtype=jnp.float32)

    center = generate_center(feature, cluster_weights)
    center = jax.block_until_ready(center)

    # Correctness check against the trivial reference (forward returns the param).
    assert center.shape == (feature_size, cluster_size)
    assert jnp.allclose(center, cluster_weights)
    print("KERNEL_OK")
</pallas_src>

<mosaic_0001>
module attributes {stable_mosaic.version = 11 : i64} {
  func.func @_center_kernel(%arg0: memref<32x16xf32, #tpu.memory_space<vmem>>, %arg1: memref<32x16xf32, #tpu.memory_space<vmem>>) attributes {dimension_semantics = [], scalar_prefetch = 0 : i64, scratch_operands = 0 : i64, tpu.core_type = #tpu.core_type<tc>} {
    %c0 = arith.constant 0 : index
    %c0_0 = arith.constant 0 : index
    %0 = vector.load %arg0[%c0, %c0_0] : memref<32x16xf32, #tpu.memory_space<vmem>>, vector<32x16xf32>
    %c0_1 = arith.constant 0 : index
    %c0_2 = arith.constant 0 : index
    %1 = vector.load %arg1[%c0_1, %c0_2] : memref<32x16xf32, #tpu.memory_space<vmem>>, vector<32x16xf32>
    tpu.vector_store %arg1[%c0_1, %c0_2], %0 {strides = array<i32>} : memref<32x16xf32, #tpu.memory_space<vmem>>, vector<32x16xf32>,
    return
  }
}

</mosaic_0001>

<llo_original>
// kernel: tpu_custom_call.1
$region0: #{tpu_custom_call.1}
  #allocation0 [shape = 'u32[]', space=smem, size = 0x4, offset = 0x4, fixed_abs, tag = 'smem constant byte address 0x4 - core index']
  #allocation1 [shape = 'u32[144,128]{1,0:T(1,128)}', space=vmem, size = 0x12000, scoped, tag = 'internal scratch']
  %s0 = inlined_call_operand.vmem [shape: f32[32,16], index: 0, kind: input, shape index: {}, may-alias: {0,1}]
  %s1 = inlined_call_operand.vmem [shape: f32[32,16], index: 1, kind: output, shape index: {}, may-alias: {0,1}]
  %s2 = sld [smem:[#allocation0]]
  $region14: #{tpu_custom_call.1} parent=0
    _
  %s4 = ssub.s32 1, %s2
  %s5 = scalar_select 0, %s4, %s2
  // Predicated region
  $region2: #{tpu_custom_call.1} parent=0 // pred_check
    _
  $region3: #{tpu_custom_call.1} parent=0 // pred_check_branch
    %7 = sbr.rel (0) target = $region5
  $region4: #{tpu_custom_call.1} parent=0 // pred_region
    _
  $region5: #{tpu_custom_call.1} parent=0 // pred_fallthru
    _
  %v8 = vld [vmem:[%s0] sm:$0xff]
  %v9 = vld [vmem:[%s0 + $0x8] sm:$0xff]
  %v10 = vld [vmem:[%s0 + $0x10] sm:$0xff]
  %v11 = vld [vmem:[%s0 + $0x18] sm:$0xff]
  %vm12 = vcmask 130048
  %13 = vst.msk [vmem:[%s1] sm:$0xff] %vm12, %v8
  %14 = vst.msk [vmem:[%s1 + $0x8] sm:$0xff] %vm12, %v9
  %15 = vst.msk [vmem:[%s1 + $0x10] sm:$0xff] %vm12, %v10
  %16 = vst.msk [vmem:[%s1 + $0x18] sm:$0xff] %vm12, %v11
  // Predicated region
  $region6: #{tpu_custom_call.1} parent=0 // pred_check
    _
  $region7: #{tpu_custom_call.1} parent=0 // pred_check_branch
    %18 = sbr.rel (0) target = $region9
  $region8: #{tpu_custom_call.1} parent=0 // pred_region
    _
  $region9: #{tpu_custom_call.1} parent=0 // pred_fallthru
    _
  // Predicated region
  $region10: #{tpu_custom_call.1} parent=0 // pred_check
    _
  $region11: #{tpu_custom_call.1} parent=0 // pred_check_branch
    %20 = sbr.rel (0) target = $region13
  $region12: #{tpu_custom_call.1} parent=0 // pred_region
    _
  $region13: #{tpu_custom_call.1} parent=0 // pred_fallthru
    _

</llo_original>
